<compile_context>
chip_gen: v6e
topology: v6e:2x2x1
jax: 0.10.0
libtpu: 0.0.40
codegen_flags: <defaults>
</compile_context>

<pallas_src>
import functools

import jax
import jax.numpy as jnp
from jax import lax
from jax.experimental import pallas as pl
from jax.experimental.pallas import tpu as pltpu

START_TAG = '<START>'
STOP_TAG = '<STOP>'
NEG_PAD = -1e30  # finite pad for the tag axis: exp() underflows to 0, and 0 * pad stays finite


def _crf_kernel(feats_ref, emit_oh_ref, exp_trans_t_ref, trans_ref, pair_cnt_ref,
                out_ref, *, start_idx, stop_idx, seq_len):
    tp = exp_trans_t_ref.shape[1]             # padded tag dim (128)

    feats = feats_ref[...]                    # (S_pad, TP) raw emission scores
    exp_trans_t = exp_trans_t_ref[...]        # (TP, TP)  exp(trans[next, prev]) laid out [prev, next]
    exp_feats = jnp.exp(feats)                # one vectorized EUP pass, off the serial chain

    # -------- forward algorithm (log partition), exp-domain recursion --------
    # carry: ef ~ exp(forward_var - logz)  (1, TP),  logz = scalar log-scale  (1, 1)
    lane = lax.broadcasted_iota(jnp.int32, (1, tp), 1)
    ef = jnp.where(lane == start_idx, 1.0, 0.0).astype(jnp.float32)  # exp(init_alphas) == one-hot(START)
    logz = jnp.zeros((1, 1), jnp.float32)

    for i in range(seq_len):                  # fully unrolled: seq_len is a compile-time int
        # s[next] = sum_prev ef[prev] * exp(trans[next, prev])            (MXU matvec)
        s = jnp.dot(ef, exp_trans_t, preferred_element_type=jnp.float32)  # (1, TP)
        ef_u = s * exp_feats[i:i + 1, :]                                  # (1, TP)  VPU
        m = jnp.max(ef_u, axis=-1, keepdims=True)                         # (1, 1)   XLU
        r = pl.reciprocal(m, approx=True)                                 # (1, 1)   EUP (tiny)
        ef = ef_u * r                                                     # (1, TP)  VPU
        logz = logz - jnp.log(r)   # exact: uses the same approximate r that rescaled ef

    # terminal: logsumexp(fv + trans[STOP, :]) = logz + log(sum ef * exp(trans[STOP, :]))
    exp_stop = jnp.exp(trans_ref[pl.ds(stop_idx, 1), :])                  # (1, TP) one 128-wide exp
    fwd = logz + jnp.log(jnp.sum(ef * exp_stop, axis=-1, keepdims=True))  # (1, 1)

    # -------- gold (sentence) score: two masked reductions --------
    emit = jnp.sum(feats * emit_oh_ref[...], axis=1, keepdims=True)       # (S_pad, 1)
    emit = jnp.sum(emit, axis=0, keepdims=True)                           # (1, 1)
    trg = jnp.sum(trans_ref[...] * pair_cnt_ref[...], axis=1, keepdims=True)  # (TP, 1)
    trg = jnp.sum(trg, axis=0, keepdims=True)                             # (1, 1)

    out_ref[...] = (fwd - emit - trg) * (1.0 / float(seq_len))            # (1, 1)


def make_crf_transitions(tag_to_ix, key):
    """Deterministic synthetic parameters matching CRF.__init__ (randn + masks)."""
    t = len(tag_to_ix)
    trans = jax.random.normal(key, (t, t), dtype=jnp.float32)
    trans = trans.at[tag_to_ix[START_TAG], :].set(-10000.0)
    trans = trans.at[:, tag_to_ix[STOP_TAG]].set(-10000.0)
    return trans


def crf_forward(feats, tags, transitions, tag_to_ix, *, tag_pad=128):
    """= (forward_score - gold_score) / num_feats, returned with shape (1,) like torch."""
    s, t = feats.shape
    start_idx = int(tag_to_ix[START_TAG])
    stop_idx = int(tag_to_ix[STOP_TAG])
    s_pad = max(8, -(-s // 8) * 8)

    feats_p = jnp.zeros((s_pad, tag_pad), jnp.float32).at[:s, :t].set(feats.astype(jnp.float32))
    trans_p = jnp.full((tag_pad, tag_pad), NEG_PAD, jnp.float32).at[:t, :t].set(
        transitions.astype(jnp.float32))
    # exp(trans).T laid out [prev, next]; hoisted out of the kernel (amortized across
    # sequences sharing the transition matrix).  -10000 / NEG_PAD entries underflow to 0.
    exp_trans_t_p = jnp.exp(trans_p).T

    # Gold-path index plumbing -> lane-dense f32 masks (no int refs / iota compares in-kernel):
    #   emit_oh[i, k]      = 1  iff tags[i] == k
    #   pair_cnt[nxt, prv] = #{ i : (tags_ext[i] -> tags_ext[i+1]) == (prv -> nxt) }
    tags_i = tags.astype(jnp.int32)
    tags_ext = jnp.concatenate([jnp.array([start_idx], jnp.int32), tags_i,
                                jnp.array([stop_idx], jnp.int32)])
    emit_oh = jnp.zeros((s_pad, tag_pad), jnp.float32).at[:s, :].set(
        jax.nn.one_hot(tags_i, tag_pad, dtype=jnp.float32))
    oh_next = jax.nn.one_hot(tags_ext[1:], tag_pad, dtype=jnp.float32)    # (s+1, TP)
    oh_prev = jax.nn.one_hot(tags_ext[:-1], tag_pad, dtype=jnp.float32)   # (s+1, TP)
    pair_cnt = oh_next.T @ oh_prev                                        # (TP, TP)

    kernel = functools.partial(_crf_kernel, start_idx=start_idx, stop_idx=stop_idx, seq_len=s)

    out = pl.pallas_call(
        kernel,
        out_shape=jax.ShapeDtypeStruct((1, 1), jnp.float32),
        grid=(1,),
        in_specs=[
            pl.BlockSpec((s_pad, tag_pad), lambda i: (0, 0)),
            pl.BlockSpec((s_pad, tag_pad), lambda i: (0, 0)),
            pl.BlockSpec((tag_pad, tag_pad), lambda i: (0, 0)),
            pl.BlockSpec((tag_pad, tag_pad), lambda i: (0, 0)),
            pl.BlockSpec((tag_pad, tag_pad), lambda i: (0, 0)),
        ],
        out_specs=pl.BlockSpec((1, 1), lambda i: (0, 0)),
        compiler_params=pltpu.CompilerParams(dimension_semantics=("arbitrary",)),
    )(feats_p, emit_oh, exp_trans_t_p, trans_p, pair_cnt)

    return out.reshape(1)


def crf_forward_ref(feats, tags, transitions, tag_to_ix):
    """Pure-JAX reference mirroring the PyTorch code (for a tolerance check)."""
    start_idx = tag_to_ix[START_TAG]
    stop_idx = tag_to_ix[STOP_TAG]
    t = transitions.shape[0]
    s = feats.shape[0]

    fv = jnp.full((t,), -10000.0, jnp.float32).at[start_idx].set(0.0)

    def step(fv, feat):
        m = transitions + fv[None, :] + feat[:, None]          # [next, prev]
        mx = jnp.max(m, axis=1)
        new_fv = mx + jnp.log(jnp.sum(jnp.exp(m - mx[:, None]), axis=1))
        return new_fv, None

    fv, _ = lax.scan(step, fv, feats)
    term = fv + transitions[stop_idx]
    mx = jnp.max(term)
    fwd = mx + jnp.log(jnp.sum(jnp.exp(term - mx)))

    tags_ext = jnp.concatenate([jnp.array([start_idx], jnp.int32), tags.astype(jnp.int32)])
    gold = (jnp.sum(transitions[tags_ext[1:], tags_ext[:-1]])
            + jnp.sum(feats[jnp.arange(s), tags])
            + transitions[stop_idx, tags[-1]])
    return (fwd - gold) / s


# TODO(synk): _viterbi_decode / inference() (argmax backtracking over Python lists) is
# host-control-flow heavy and not translated; only forward() (NLL) is kernelized.
# TODO(synk): batching multiple sequences per call (ef carried as (B,128) to fill MXU
# rows, grid over batch with "parallel" for the two v7x TensorCores) is the next
# throughput lever, but CRF.forward() is defined per-sequence so the API stays 1-seq.

if __name__ == "__main__":
    tag_to_ix = {"B": 0, "I": 1, "O": 2, START_TAG: 3, STOP_TAG: 4}
    seq_len = 8

    key = jax.random.PRNGKey(0)
    k_trans, k_feats, k_tags = jax.random.split(key, 3)

    transitions = make_crf_transitions(tag_to_ix, k_trans)                       # (5, 5)
    feats = jax.random.normal(k_feats, (seq_len, len(tag_to_ix)), jnp.float32)   # (8, 5)
    tags = jax.random.randint(k_tags, (seq_len,), 0, 3, dtype=jnp.int32)         # (8,) valid tags

    loss = crf_forward(feats, tags, transitions, tag_to_ix)
    loss = jax.block_until_ready(loss)

    ref = crf_forward_ref(feats, tags, transitions, tag_to_ix)
    assert loss.shape == (1,)
    assert jnp.allclose(loss[0], ref, rtol=1e-3, atol=1e-3), (loss, ref)

    print("KERNEL_OK")
</pallas_src>

<mosaic_0001>
module attributes {stable_mosaic.version = 11 : i64} {
  func.func @_crf_kernel(%arg0: i32, %arg1: memref<8x128xf32, #tpu.memory_space<vmem>>, %arg2: memref<8x128xf32, #tpu.memory_space<vmem>>, %arg3: memref<128x128xf32, #tpu.memory_space<vmem>>, %arg4: memref<128x128xf32, #tpu.memory_space<vmem>>, %arg5: memref<128x128xf32, #tpu.memory_space<vmem>>, %arg6: memref<1x1xf32, #tpu.memory_space<vmem>>) attributes {dimension_semantics = [#tpu.dimension_semantics<arbitrary>], iteration_bounds = array<i64: 1>, scalar_prefetch = 0 : i64, scratch_operands = 0 : i64, tpu.core_type = #tpu.core_type<tc>, window_params = [{pipeline_mode = #tpu.pipeline_mode<synchronous>, transform_indices = @transform_0, window_bounds = array<i64: 8, 128>}, {pipeline_mode = #tpu.pipeline_mode<synchronous>, transform_indices = @transform_1, window_bounds = array<i64: 8, 128>}, {pipeline_mode = #tpu.pipeline_mode<synchronous>, transform_indices = @transform_2, window_bounds = array<i64: 128, 128>}, {pipeline_mode = #tpu.pipeline_mode<synchronous>, transform_indices = @transform_3, window_bounds = array<i64: 128, 128>}, {pipeline_mode = #tpu.pipeline_mode<synchronous>, transform_indices = @transform_4, window_bounds = array<i64: 128, 128>}, {pipeline_mode = #tpu.pipeline_mode<synchronous>, transform_indices = @transform_5, window_bounds = array<i64: 1, 1>}]} {
    %c0 = arith.constant 0 : index
    %c0_0 = arith.constant 0 : index
    %0 = vector.load %arg1[%c0, %c0_0] : memref<8x128xf32, #tpu.memory_space<vmem>>, vector<8x128xf32>
    %c0_1 = arith.constant 0 : index
    %c0_2 = arith.constant 0 : index
    %1 = vector.load %arg3[%c0_1, %c0_2] : memref<128x128xf32, #tpu.memory_space<vmem>>, vector<128x128xf32>
    %2 = math.exp %0 : vector<8x128xf32>
    %3 = tpu.iota {dimensions = array<i32: 1>} : vector<1x128xi32>
    %c3_i32 = arith.constant 3 : i32
    %4 = vector.broadcast %c3_i32 : i32 to vector<1x128xi32>
    %5 = arith.cmpi eq, %3, %4 : vector<1x128xi32>
    %cst = arith.constant 1.000000e+00 : f32
    %cst_3 = arith.constant 0.000000e+00 : f32
    %6 = vector.broadcast %cst : f32 to vector<1x128xf32>
    %7 = vector.broadcast %cst_3 : f32 to vector<1x128xf32>
    %8 = arith.select %5, %6, %7 : vector<1x128xi1>, vector<1x128xf32>
    %cst_4 = arith.constant 0.000000e+00 : f32
    %9 = vector.broadcast %cst_4 : f32 to vector<1x1xf32>
    %cst_5 = arith.constant dense<0.000000e+00> : vector<1x128xf32>
    %10 = tpu.matmul %8, %1, %cst_5 {dimension_numbers = #tpu.dot_dimension_numbers<[1], [0], [0], [1], [0, 0, 1, 1], [], []>} : vector<1x128xf32>, vector<128x128xf32>, vector<1x128xf32> -> vector<1x128xf32>
    %11 = vector.extract_strided_slice %2 {offsets = [0, 0], sizes = [1, 128], strides = [1, 1]} : vector<8x128xf32> to vector<1x128xf32>
    %12 = arith.mulf %10, %11 : vector<1x128xf32>
    %cst_6 = arith.constant dense<0xFF800000> : vector<1xf32>
    %13 = vector.multi_reduction <maximumf>, %12, %cst_6 [1] : vector<1x128xf32> to vector<1xf32>
    %14 = vector.shape_cast %13 : vector<1xf32> to vector<1x1xf32>
    %15 = tpu.reciprocal %14 {approx = true} : vector<1x1xf32> -> vector<1x1xf32>
    %16 = vector.broadcast %15 : vector<1x1xf32> to vector<1x128xf32>
    %17 = arith.mulf %12, %16 : vector<1x128xf32>
    %18 = math.log %15 : vector<1x1xf32>
    %19 = arith.subf %9, %18 : vector<1x1xf32>
    %cst_7 = arith.constant dense<0.000000e+00> : vector<1x128xf32>
    %20 = tpu.matmul %17, %1, %cst_7 {dimension_numbers = #tpu.dot_dimension_numbers<[1], [0], [0], [1], [0, 0, 1, 1], [], []>} : vector<1x128xf32>, vector<128x128xf32>, vector<1x128xf32> -> vector<1x128xf32>
    %21 = vector.extract_strided_slice %2 {offsets = [1, 0], sizes = [1, 128], strides = [1, 1]} : vector<8x128xf32> to vector<1x128xf32>
    %22 = arith.mulf %20, %21 : vector<1x128xf32>
    %cst_8 = arith.constant dense<0xFF800000> : vector<1xf32>
    %23 = vector.multi_reduction <maximumf>, %22, %cst_8 [1] : vector<1x128xf32> to vector<1xf32>
    %24 = vector.shape_cast %23 : vector<1xf32> to vector<1x1xf32>
    %25 = tpu.reciprocal %24 {approx = true} : vector<1x1xf32> -> vector<1x1xf32>
    %26 = vector.broadcast %25 : vector<1x1xf32> to vector<1x128xf32>
    %27 = arith.mulf %22, %26 : vector<1x128xf32>
    %28 = math.log %25 : vector<1x1xf32>
    %29 = arith.subf %19, %28 : vector<1x1xf32>
    %cst_9 = arith.constant dense<0.000000e+00> : vector<1x128xf32>
    %30 = tpu.matmul %27, %1, %cst_9 {dimension_numbers = #tpu.dot_dimension_numbers<[1], [0], [0], [1], [0, 0, 1, 1], [], []>} : vector<1x128xf32>, vector<128x128xf32>, vector<1x128xf32> -> vector<1x128xf32>
    %31 = vector.extract_strided_slice %2 {offsets = [2, 0], sizes = [1, 128], strides = [1, 1]} : vector<8x128xf32> to vector<1x128xf32>
    %32 = arith.mulf %30, %31 : vector<1x128xf32>
    %cst_10 = arith.constant dense<0xFF800000> : vector<1xf32>
    %33 = vector.multi_reduction <maximumf>, %32, %cst_10 [1] : vector<1x128xf32> to vector<1xf32>
    %34 = vector.shape_cast %33 : vector<1xf32> to vector<1x1xf32>
    %35 = tpu.reciprocal %34 {approx = true} : vector<1x1xf32> -> vector<1x1xf32>
    %36 = vector.broadcast %35 : vector<1x1xf32> to vector<1x128xf32>
    %37 = arith.mulf %32, %36 : vector<1x128xf32>
    %38 = math.log %35 : vector<1x1xf32>
    %39 = arith.subf %29, %38 : vector<1x1xf32>
    %cst_11 = arith.constant dense<0.000000e+00> : vector<1x128xf32>
    %40 = tpu.matmul %37, %1, %cst_11 {dimension_numbers = #tpu.dot_dimension_numbers<[1], [0], [0], [1], [0, 0, 1, 1], [], []>} : vector<1x128xf32>, vector<128x128xf32>, vector<1x128xf32> -> vector<1x128xf32>
    %41 = vector.extract_strided_slice %2 {offsets = [3, 0], sizes = [1, 128], strides = [1, 1]} : vector<8x128xf32> to vector<1x128xf32>
    %42 = arith.mulf %40, %41 : vector<1x128xf32>
    %cst_12 = arith.constant dense<0xFF800000> : vector<1xf32>
    %43 = vector.multi_reduction <maximumf>, %42, %cst_12 [1] : vector<1x128xf32> to vector<1xf32>
    %44 = vector.shape_cast %43 : vector<1xf32> to vector<1x1xf32>
    %45 = tpu.reciprocal %44 {approx = true} : vector<1x1xf32> -> vector<1x1xf32>
    %46 = vector.broadcast %45 : vector<1x1xf32> to vector<1x128xf32>
    %47 = arith.mulf %42, %46 : vector<1x128xf32>
    %48 = math.log %45 : vector<1x1xf32>
    %49 = arith.subf %39, %48 : vector<1x1xf32>
    %cst_13 = arith.constant dense<0.000000e+00> : vector<1x128xf32>
    %50 = tpu.matmul %47, %1, %cst_13 {dimension_numbers = #tpu.dot_dimension_numbers<[1], [0], [0], [1], [0, 0, 1, 1], [], []>} : vector<1x128xf32>, vector<128x128xf32>, vector<1x128xf32> -> vector<1x128xf32>
    %51 = vector.extract_strided_slice %2 {offsets = [4, 0], sizes = [1, 128], strides = [1, 1]} : vector<8x128xf32> to vector<1x128xf32>
    %52 = arith.mulf %50, %51 : vector<1x128xf32>
    %cst_14 = arith.constant dense<0xFF800000> : vector<1xf32>
    %53 = vector.multi_reduction <maximumf>, %52, %cst_14 [1] : vector<1x128xf32> to vector<1xf32>
    %54 = vector.shape_cast %53 : vector<1xf32> to vector<1x1xf32>
    %55 = tpu.reciprocal %54 {approx = true} : vector<1x1xf32> -> vector<1x1xf32>
    %56 = vector.broadcast %55 : vector<1x1xf32> to vector<1x128xf32>
    %57 = arith.mulf %52, %56 : vector<1x128xf32>
    %58 = math.log %55 : vector<1x1xf32>
    %59 = arith.subf %49, %58 : vector<1x1xf32>
    %cst_15 = arith.constant dense<0.000000e+00> : vector<1x128xf32>
    %60 = tpu.matmul %57, %1, %cst_15 {dimension_numbers = #tpu.dot_dimension_numbers<[1], [0], [0], [1], [0, 0, 1, 1], [], []>} : vector<1x128xf32>, vector<128x128xf32>, vector<1x128xf32> -> vector<1x128xf32>
    %61 = vector.extract_strided_slice %2 {offsets = [5, 0], sizes = [1, 128], strides = [1, 1]} : vector<8x128xf32> to vector<1x128xf32>
    %62 = arith.mulf %60, %61 : vector<1x128xf32>
    %cst_16 = arith.constant dense<0xFF800000> : vector<1xf32>
    %63 = vector.multi_reduction <maximumf>, %62, %cst_16 [1] : vector<1x128xf32> to vector<1xf32>
    %64 = vector.shape_cast %63 : vector<1xf32> to vector<1x1xf32>
    %65 = tpu.reciprocal %64 {approx = true} : vector<1x1xf32> -> vector<1x1xf32>
    %66 = vector.broadcast %65 : vector<1x1xf32> to vector<1x128xf32>
    %67 = arith.mulf %62, %66 : vector<1x128xf32>
    %68 = math.log %65 : vector<1x1xf32>
    %69 = arith.subf %59, %68 : vector<1x1xf32>
    %cst_17 = arith.constant dense<0.000000e+00> : vector<1x128xf32>
    %70 = tpu.matmul %67, %1, %cst_17 {dimension_numbers = #tpu.dot_dimension_numbers<[1], [0], [0], [1], [0, 0, 1, 1], [], []>} : vector<1x128xf32>, vector<128x128xf32>, vector<1x128xf32> -> vector<1x128xf32>
    %71 = vector.extract_strided_slice %2 {offsets = [6, 0], sizes = [1, 128], strides = [1, 1]} : vector<8x128xf32> to vector<1x128xf32>
    %72 = arith.mulf %70, %71 : vector<1x128xf32>
    %cst_18 = arith.constant dense<0xFF800000> : vector<1xf32>
    %73 = vector.multi_reduction <maximumf>, %72, %cst_18 [1] : vector<1x128xf32> to vector<1xf32>
    %74 = vector.shape_cast %73 : vector<1xf32> to vector<1x1xf32>
    %75 = tpu.reciprocal %74 {approx = true} : vector<1x1xf32> -> vector<1x1xf32>
    %76 = vector.broadcast %75 : vector<1x1xf32> to vector<1x128xf32>
    %77 = arith.mulf %72, %76 : vector<1x128xf32>
    %78 = math.log %75 : vector<1x1xf32>
    %79 = arith.subf %69, %78 : vector<1x1xf32>
    %cst_19 = arith.constant dense<0.000000e+00> : vector<1x128xf32>
    %80 = tpu.matmul %77, %1, %cst_19 {dimension_numbers = #tpu.dot_dimension_numbers<[1], [0], [0], [1], [0, 0, 1, 1], [], []>} : vector<1x128xf32>, vector<128x128xf32>, vector<1x128xf32> -> vector<1x128xf32>
    %81 = vector.extract_strided_slice %2 {offsets = [7, 0], sizes = [1, 128], strides = [1, 1]} : vector<8x128xf32> to vector<1x128xf32>
    %82 = arith.mulf %80, %81 : vector<1x128xf32>
    %cst_20 = arith.constant dense<0xFF800000> : vector<1xf32>
    %83 = vector.multi_reduction <maximumf>, %82, %cst_20 [1] : vector<1x128xf32> to vector<1xf32>
    %84 = vector.shape_cast %83 : vector<1xf32> to vector<1x1xf32>
    %85 = tpu.reciprocal %84 {approx = true} : vector<1x1xf32> -> vector<1x1xf32>
    %86 = vector.broadcast %85 : vector<1x1xf32> to vector<1x128xf32>
    %87 = arith.mulf %82, %86 : vector<1x128xf32>
    %88 = math.log %85 : vector<1x1xf32>
    %89 = arith.subf %79, %88 : vector<1x1xf32>
    %c4 = arith.constant 4 : index
    %c0_21 = arith.constant 0 : index
    %90 = vector.load %arg4[%c4, %c0_21] : memref<128x128xf32, #tpu.memory_space<vmem>>, vector<1x128xf32>
    %91 = math.exp %90 : vector<1x128xf32>
    %92 = arith.mulf %87, %91 : vector<1x128xf32>
    %cst_22 = arith.constant dense<0.000000e+00> : vector<1xf32>
    %93 = vector.multi_reduction <add>, %92, %cst_22 [1] : vector<1x128xf32> to vector<1xf32>
    %94 = vector.shape_cast %93 : vector<1xf32> to vector<1x1xf32>
    %95 = math.log %94 : vector<1x1xf32>
    %96 = arith.addf %89, %95 : vector<1x1xf32>
    %c0_23 = arith.constant 0 : index
    %c0_24 = arith.constant 0 : index
    %97 = vector.load %arg2[%c0_23, %c0_24] : memref<8x128xf32, #tpu.memory_space<vmem>>, vector<8x128xf32>
    %98 = arith.mulf %0, %97 : vector<8x128xf32>
    %cst_25 = arith.constant dense<0.000000e+00> : vector<8xf32>
    %99 = vector.multi_reduction <add>, %98, %cst_25 [1] : vector<8x128xf32> to vector<8xf32>
    %100 = vector.shape_cast %99 : vector<8xf32> to vector<8x1xf32>
    %cst_26 = arith.constant dense<0.000000e+00> : vector<1xf32>
    %101 = vector.multi_reduction <add>, %100, %cst_26 [0] : vector<8x1xf32> to vector<1xf32>
    %102 = vector.shape_cast %101 : vector<1xf32> to vector<1x1xf32>
    %c0_27 = arith.constant 0 : index
    %c0_28 = arith.constant 0 : index
    %103 = vector.load %arg4[%c0_27, %c0_28] : memref<128x128xf32, #tpu.memory_space<vmem>>, vector<128x128xf32>
    %c0_29 = arith.constant 0 : index
    %c0_30 = arith.constant 0 : index
    %104 = vector.load %arg5[%c0_29, %c0_30] : memref<128x128xf32, #tpu.memory_space<vmem>>, vector<128x128xf32>
    %105 = arith.mulf %103, %104 : vector<128x128xf32>
    %cst_31 = arith.constant dense<0.000000e+00> : vector<128xf32>
    %106 = vector.multi_reduction <add>, %105, %cst_31 [1] : vector<128x128xf32> to vector<128xf32>
    %107 = vector.shape_cast %106 : vector<128xf32> to vector<128x1xf32>
    %cst_32 = arith.constant dense<0.000000e+00> : vector<1xf32>
    %108 = vector.multi_reduction <add>, %107, %cst_32 [0] : vector<128x1xf32> to vector<1xf32>
    %109 = vector.shape_cast %108 : vector<1xf32> to vector<1x1xf32>
    %110 = arith.subf %96, %102 : vector<1x1xf32>
    %111 = arith.subf %110, %109 : vector<1x1xf32>
    %cst_33 = arith.constant 1.250000e-01 : f32
    %112 = vector.broadcast %cst_33 : f32 to vector<1x1xf32>
    %113 = arith.mulf %111, %112 : vector<1x1xf32>
    %c0_34 = arith.constant 0 : index
    %c0_35 = arith.constant 0 : index
    %114 = vector.load %arg6[%c0_34, %c0_35] : memref<1x1xf32, #tpu.memory_space<vmem>>, vector<1x1xf32>
    tpu.vector_store %arg6[%c0_34, %c0_35], %113 {strides = array<i32>} : memref<1x1xf32, #tpu.memory_space<vmem>>, vector<1x1xf32>,
    return
  }
  func.func @transform_0(%arg0: i32) -> (i32, i32) {
    %c0_i32 = arith.constant 0 : i32
    %c0_i32_0 = arith.constant 0 : i32
    %c0_i32_1 = arith.constant 0 : i32
    return %c0_i32, %c0_i32_0 : i32, i32
  }
  func.func @transform_1(%arg0: i32) -> (i32, i32) {
    %c0_i32 = arith.constant 0 : i32
    %c0_i32_0 = arith.constant 0 : i32
    %c0_i32_1 = arith.constant 0 : i32
    return %c0_i32, %c0_i32_0 : i32, i32
  }
  func.func @transform_2(%arg0: i32) -> (i32, i32) {
    %c0_i32 = arith.constant 0 : i32
    %c0_i32_0 = arith.constant 0 : i32
    %c0_i32_1 = arith.constant 0 : i32
    return %c0_i32, %c0_i32_0 : i32, i32
  }
  func.func @transform_3(%arg0: i32) -> (i32, i32) {
    %c0_i32 = arith.constant 0 : i32
    %c0_i32_0 = arith.constant 0 : i32
    %c0_i32_1 = arith.constant 0 : i32
    return %c0_i32, %c0_i32_0 : i32, i32
  }
  func.func @transform_4(%arg0: i32) -> (i32, i32) {
    %c0_i32 = arith.constant 0 : i32
    %c0_i32_0 = arith.constant 0 : i32
    %c0_i32_1 = arith.constant 0 : i32
    return %c0_i32, %c0_i32_0 : i32, i32
  }
  func.func @transform_5(%arg0: i32) -> (i32, i32) {
    %c0_i32 = arith.constant 0 : i32
    %c0_i32_0 = arith.constant 0 : i32
    %c0_i32_1 = arith.constant 0 : i32
    return %c0_i32, %c0_i32_0 : i32, i32
  }
}

</mosaic_0001>

<llo_original>
// kernel: tpu_custom_call.1
$region0: #{tpu_custom_call.1}
  #allocation0 [shape = 'u32[]', space=smem, size = 0x4, offset = 0x4, fixed_abs, tag = 'smem constant byte address 0x4 - core index']
  #allocation1 [shape = 'u32[144,128]{1,0:T(1,128)}', space=vmem, size = 0x12000, scoped, tag = 'internal scratch']
  %s0 = inlined_call_operand.hbm [shape: f32[8,128], index: 0, kind: input, shape index: {}]
  %s1 = inlined_call_operand.hbm [shape: f32[8,128], index: 1, kind: input, shape index: {}]
  %s2 = inlined_call_operand.hbm [shape: f32[128,128], index: 2, kind: input, shape index: {}]
  %s3 = inlined_call_operand.hbm [shape: f32[128,128], index: 3, kind: input, shape index: {}]
  %s4 = inlined_call_operand.hbm [shape: f32[128,128], index: 4, kind: input, shape index: {}]
  %s5 = inlined_call_operand.hbm [shape: f32[1,1], index: 5, kind: output, shape index: {}]
  %s6 = sld [smem:[#allocation0]]
  $region50: #{tpu_custom_call.1} parent=0
    _
  %s8 = ssub.s32 1, %s6
  %s9 = scalar_select 0, %s8, %s6
  $region1: #{tpu_custom_call.1} parent=0
    #allocation2 [shape = 'u8[4096]{0}', space=vmem, size = 0x1000, scoped, tag = 'input window, operand 0, single buffered']
    #allocation3 [shape = 's32[1]{0}', space=sflag, size = 0x4, scoped, tag = 'scoped memory for tpu_custom_call.1']
    #allocation4 [shape = 's32[1]{0}', space=sflag, size = 0x4, scoped, tag = 'scoped memory for tpu_custom_call.1']
    #allocation5 [shape = 'u8[4096]{0}', space=vmem, size = 0x1000, scoped, tag = 'input window, operand 1, single buffered']
    #allocation6 [shape = 's32[1]{0}', space=sflag, size = 0x4, scoped, tag = 'scoped memory for tpu_custom_call.1']
    #allocation7 [shape = 'u8[65536]{0}', space=vmem, size = 0x10000, scoped, tag = 'input window, operand 2, single buffered']
    #allocation8 [shape = 'u8[65536]{0}', space=vmem, size = 0x10000, scoped, tag = 'input window, operand 3, single buffered']
    #allocation9 [shape = 's32[1]{0}', space=sflag, size = 0x4, scoped, tag = 'scoped memory for tpu_custom_call.1']
    #allocation10 [shape = 'u8[65536]{0}', space=vmem, size = 0x10000, scoped, tag = 'input window, operand 4, single buffered']
    #allocation11 [shape = 'u8[512]{0}', space=vmem, size = 0x400, scoped, tag = 'output window, operand 0, single buffered']
    %10 = vsyncpa [#allocation3], 0
    %11 = vsyncpa [#allocation6], 0
    %12 = vsyncpa [#allocation9], 0
    %13 = vsyncpa [#allocation4], 0
    // Predicated region
    $region2: #{tpu_custom_call.1} parent=1 // pred_check
      _
    $region3: #{tpu_custom_call.1} parent=1 // pred_check_branch
      %15 = sbr.rel (0) target = $region5
    $region4: #{tpu_custom_call.1} parent=1 // pred_region
      %s17 = ssub.s32 128, 128
      %18 = vsyncadd [#allocation3], %s17
      %s20 = sshll.u32 [#allocation2], 4
      %s21 = int_to_ptr.vmem [resolvable:$true] %s20
      %23 = dma.hbm_to_vmem [thread:$0]  %s0, 128, %s21, [#allocation3]
    $region5: #{tpu_custom_call.1} parent=1 // pred_fallthru
      _
    // Predicated region
    $region6: #{tpu_custom_call.1} parent=1 // pred_check
      _
    $region7: #{tpu_custom_call.1} parent=1 // pred_check_branch
      %25 = sbr.rel (0) target = $region9
    $region8: #{tpu_custom_call.1} parent=1 // pred_region
      %s27 = ssub.s32 128, 128
      %28 = vsyncadd [#allocation6], %s27
      %s30 = sshll.u32 [#allocation5], 4
      %s31 = int_to_ptr.vmem [resolvable:$true] %s30
      %33 = dma.hbm_to_vmem [thread:$0]  %s1, 128, %s31, [#allocation6]
    $region9: #{tpu_custom_call.1} parent=1 // pred_fallthru
      _
    // Predicated region
    $region10: #{tpu_custom_call.1} parent=1 // pred_check
      _
    $region11: #{tpu_custom_call.1} parent=1 // pred_check_branch
      %35 = sbr.rel (0) target = $region13
    $region12: #{tpu_custom_call.1} parent=1 // pred_region
      %s37 = ssub.s32 2048, 2048
      %38 = vsyncadd [#allocation6], %s37
      %s39 = sshll.u32 [#allocation7], 4
      %s40 = int_to_ptr.vmem [resolvable:$true] %s39
      %45 = dma.hbm_to_vmem [thread:$0]  %s2, 2048, %s40, [#allocation6], 128, 128, 8
    $region13: #{tpu_custom_call.1} parent=1 // pred_fallthru
      _
    // Predicated region
    $region14: #{tpu_custom_call.1} parent=1 // pred_check
      _
    $region15: #{tpu_custom_call.1} parent=1 // pred_check_branch
      %47 = sbr.rel (0) target = $region17
    $region16: #{tpu_custom_call.1} parent=1 // pred_region
      %s49 = ssub.s32 2048, 2048
      %50 = vsyncadd [#allocation9], %s49
      %s51 = sshll.u32 [#allocation8], 4
      %s52 = int_to_ptr.vmem [resolvable:$true] %s51
      %57 = dma.hbm_to_vmem [thread:$0]  %s3, 2048, %s52, [#allocation9], 128, 128, 8
    $region17: #{tpu_custom_call.1} parent=1 // pred_fallthru
      _
    // Predicated region
    $region18: #{tpu_custom_call.1} parent=1 // pred_check
      _
    $region19: #{tpu_custom_call.1} parent=1 // pred_check_branch
      %59 = sbr.rel (0) target = $region21
    $region20: #{tpu_custom_call.1} parent=1 // pred_region
      %s61 = ssub.s32 2048, 2048
      %62 = vsyncadd [#allocation9], %s61
      %s63 = sshll.u32 [#allocation10], 4
      %s64 = int_to_ptr.vmem [resolvable:$true] %s63
      %69 = dma.hbm_to_vmem [thread:$0]  %s4, 2048, %s64, [#allocation9], 128, 128, 8
    $region21: #{tpu_custom_call.1} parent=1 // pred_fallthru
      _
    // Predicated region
    $region22: #{tpu_custom_call.1} parent=1 // pred_check
      _
    $region23: #{tpu_custom_call.1} parent=1 // pred_check_branch
      %71 = sbr.rel (0) target = $region25
    $region24: #{tpu_custom_call.1} parent=1 // pred_region
      %72 = dma.done [#allocation3], 128
    $region25: #{tpu_custom_call.1} parent=1 // pred_fallthru
      _
    // Predicated region
    $region26: #{tpu_custom_call.1} parent=1 // pred_check
      _
    $region27: #{tpu_custom_call.1} parent=1 // pred_check_branch
      %74 = sbr.rel (0) target = $region29
    $region28: #{tpu_custom_call.1} parent=1 // pred_region
      %75 = dma.done [#allocation6], 128
    $region29: #{tpu_custom_call.1} parent=1 // pred_fallthru
      _
    // Predicated region
    $region30: #{tpu_custom_call.1} parent=1 // pred_check
      _
    $region31: #{tpu_custom_call.1} parent=1 // pred_check_branch
      %77 = sbr.rel (0) target = $region33
    $region32: #{tpu_custom_call.1} parent=1 // pred_region
      %78 = dma.done [#allocation6], 2048
    $region33: #{tpu_custom_call.1} parent=1 // pred_fallthru
      _
    // Predicated region
    $region34: #{tpu_custom_call.1} parent=1 // pred_check
      _
    $region35: #{tpu_custom_call.1} parent=1 // pred_check_branch
      %80 = sbr.rel (0) target = $region37
    $region36: #{tpu_custom_call.1} parent=1 // pred_region
      %81 = dma.done [#allocation9], 2048
    $region37: #{tpu_custom_call.1} parent=1 // pred_fallthru
      _
    // Predicated region
    $region38: #{tpu_custom_call.1} parent=1 // pred_check
      _
    $region39: #{tpu_custom_call.1} parent=1 // pred_check_branch
      %83 = sbr.rel (0) target = $region41
    $region40: #{tpu_custom_call.1} parent=1 // pred_region
      %84 = dma.done [#allocation9], 2048
    $region41: #{tpu_custom_call.1} parent=1 // pred_fallthru
      _
    %v85 = vld [vmem:[#allocation2] sm:$0xff]
    %v86 = vld [vmem:[#allocation7] sm:$0xff]
    %v87 = vld [vmem:[#allocation7 + $0x8] sm:$0xff]
    %v88 = vld [vmem:[#allocation7 + $0x10] sm:$0xff]
    %v89 = vld [vmem:[#allocation7 + $0x18] sm:$0xff]
    %v90 = vld [vmem:[#allocation7 + $0x20] sm:$0xff]
    %v91 = vld [vmem:[#allocation7 + $0x28] sm:$0xff]
    %v92 = vld [vmem:[#allocation7 + $0x30] sm:$0xff]
    %v93 = vld [vmem:[#allocation7 + $0x38] sm:$0xff]
    %v94 = vld [vmem:[#allocation7 + $0x40] sm:$0xff]
    %v95 = vld [vmem:[#allocation7 + $0x48] sm:$0xff]
    %v96 = vld [vmem:[#allocation7 + $0x50] sm:$0xff]
    %v97 = vld [vmem:[#allocation7 + $0x58] sm:$0xff]
    %v98 = vld [vmem:[#allocation7 + $0x60] sm:$0xff]
    %v99 = vld [vmem:[#allocation7 + $0x68] sm:$0xff]
    %v100 = vld [vmem:[#allocation7 + $0x70] sm:$0xff]
    %v101 = vld [vmem:[#allocation7 + $0x78] sm:$0xff]
    %v102 = vmul.f32 %v85, 1.442695
    %v103 = vpow.pop %v102
    %v104 = vlaneseq
    %v105 = vand.u32 %v104, 127
    %vm106 = vcmp.eq.s32.totalorder %v105, 3
    %v107 = vsel %vm106, 1.0, 0.0
    %108 = vmatprep.subr.mxu0 0.0
    %109 = vmatpush1.msra.mxu0 %v101
    %110 = vmatprep.subr.mxu0 0.0
    %111 = vmatpush1.msra.mxu0 %v100
    %112 = vmatprep.subr.mxu0 0.0
    %113 = vmatpush1.msra.mxu0 %v99
    %114 = vmatprep.subr.mxu0 0.0
    %115 = vmatpush1.msra.mxu0 %v98
    %116 = vmatprep.subr.mxu0 0.0
    %117 = vmatpush1.msra.mxu0 %v97
    %118 = vmatprep.subr.mxu0 0.0
    %119 = vmatpush1.msra.mxu0 %v96
    %120 = vmatprep.subr.mxu0 0.0
    %121 = vmatpush1.msra.mxu0 %v95
    %122 = vmatprep.subr.mxu0 0.0
    %123 = vmatpush1.msra.mxu0 %v94
    %124 = vmatprep.subr.mxu0 0.0
    %125 = vmatpush1.msra.mxu0 %v93
    %126 = vmatprep.subr.mxu0 0.0
    %127 = vmatpush1.msra.mxu0 %v92
    %128 = vmatprep.subr.mxu0 0.0
    %129 = vmatpush1.msra.mxu0 %v91
    %130 = vmatprep.subr.mxu0 0.0
    %131 = vmatpush1.msra.mxu0 %v90
    %132 = vmatprep.subr.mxu0 0.0
    %133 = vmatpush1.msra.mxu0 %v89
    %134 = vmatprep.subr.mxu0 0.0
    %135 = vmatpush1.msra.mxu0 %v88
    %136 = vmatprep.subr.mxu0 0.0
    %137 = vmatpush1.msra.mxu0 %v87
    %138 = vmatprep.subr.mxu0 0.0
    %139 = vmatpush1.msra.mxu0 %v86
    %140 = vmatprep.subr.mxu0 0.0
    %141 = vmatpush2.msra.mxu0 0.0
    %142 = vmatprep.subr.mxu0 0.0
    %143 = vmatpush2.msra.mxu0 0.0
    %144 = vmatprep.subr.mxu0 0.0
    %145 = vmatpush2.msra.mxu0 0.0
    %146 = vmatprep.subr.mxu0 0.0
    %147 = vmatpush2.msra.mxu0 0.0
    %148 = vmatprep.subr.mxu0 0.0
    %149 = vmatpush2.msra.mxu0 0.0
    %150 = vmatprep.subr.mxu0 0.0
    %151 = vmatpush2.msra.mxu0 0.0
    %152 = vmatprep.subr.mxu0 0.0
    %153 = vmatpush2.msra.mxu0 0.0
    %154 = vmatprep.subr.mxu0 0.0
    %155 = vmatpush2.msra.mxu0 0.0
    %156 = vmatprep.subr.mxu0 0.0
    %157 = vmatpush2.msra.mxu0 0.0
    %158 = vmatprep.subr.mxu0 0.0
    %159 = vmatpush2.msra.mxu0 0.0
    %160 = vmatprep.subr.mxu0 0.0
    %161 = vmatpush2.msra.mxu0 0.0
    %162 = vmatprep.subr.mxu0 0.0
    %163 = vmatpush2.msra.mxu0 0.0
    %164 = vmatprep.subr.mxu0 0.0
    %165 = vmatpush2.msra.mxu0 0.0
    %166 = vmatprep.subr.mxu0 0.0
    %167 = vmatpush2.msra.mxu0 0.0
    %168 = vmatprep.subr.mxu0 0.0
    %169 = vmatpush2.msra.mxu0 0.0
    %170 = vmatprep.subr.mxu0 0.0
    %171 = vmatpush2.msra.mxu0 0.0
    %172 = vmatprep.mubr.f32.mxu0 0.0
    %173 = vmatmul.mubr.f32.gmra.mxu0 %v107
    %v174 = vpop.f32.mrf.mxu0
    %v175 = vadd.f32 0.0, %v174
    %v176 = vpop.f32.mrf.mxu0
    %177 = vdwg.mxu0
    %v178 = vmul.f32 %v175, %v103
    %vm179 = vcmask 1040384
    %v180 = vsel %vm179, %v178, -inf
    %181 = vmax.xlane.f32.xlu0 %v180
    %v182 = vpop.xlane.xlu0 %181
    %v183 = vrcp.pop %v182
    %v184 = vmul.f32 %v178, %v183
    %v185 = vlog2.pop %v183
    %v186 = vmul.f32 %v185, 0.6931472
    %v187 = vsub.f32 0.0, %v186
    %188 = vmatprep.subr.mxu0 0.0
    %189 = vmatpush1.msra.mxu0 %v101
    %190 = vmatprep.subr.mxu0 0.0
    %191 = vmatpush1.msra.mxu0 %v100
    %192 = vmatprep.subr.mxu0 0.0
    %193 = vmatpush1.msra.mxu0 %v99
    %194 = vmatprep.subr.mxu0 0.0
    %195 = vmatpush1.msra.mxu0 %v98
    %196 = vmatprep.subr.mxu0 0.0
    %197 = vmatpush1.msra.mxu0 %v97
    %198 = vmatprep.subr.mxu0 0.0
    %199 = vmatpush1.msra.mxu0 %v96
    %200 = vmatprep.subr.mxu0 0.0
    %201 = vmatpush1.msra.mxu0 %v95
    %202 = vmatprep.subr.mxu0 0.0
    %203 = vmatpush1.msra.mxu0 %v94
    %204 = vmatprep.subr.mxu0 0.0
    %205 = vmatpush1.msra.mxu0 %v93
    %206 = vmatprep.subr.mxu0 0.0
    %207 = vmatpush1.msra.mxu0 %v92
    %208 = vmatprep.subr.mxu0 0.0
    %209 = vmatpush1.msra.mxu0 %v91
    %210 = vmatprep.subr.mxu0 0.0
    %211 = vmatpush1.msra.mxu0 %v90
    %212 = vmatprep.subr.mxu0 0.0
    %213 = vmatpush1.msra.mxu0 %v89
    %214 = vmatprep.subr.mxu0 0.0
    %215 = vmatpush1.msra.mxu0 %v88
    %216 = vmatprep.subr.mxu0 0.0
    %217 = vmatpush1.msra.mxu0 %v87
    %218 = vmatprep.subr.mxu0 0.0
    %219 = vmatpush1.msra.mxu0 %v86
    %220 = vmatprep.subr.mxu0 0.0
    %221 = vmatpush2.msra.mxu0 0.0
    %222 = vmatprep.subr.mxu0 0.0
    %223 = vmatpush2.msra.mxu0 0.0
    %224 = vmatprep.subr.mxu0 0.0
    %225 = vmatpush2.msra.mxu0 0.0
    %226 = vmatprep.subr.mxu0 0.0
    %227 = vmatpush2.msra.mxu0 0.0
    %228 = vmatprep.subr.mxu0 0.0
    %229 = vmatpush2.msra.mxu0 0.0
    %230 = vmatprep.subr.mxu0 0.0
    %231 = vmatpush2.msra.mxu0 0.0
    %232 = vmatprep.subr.mxu0 0.0
    %233 = vmatpush2.msra.mxu0 0.0
    %234 = vmatprep.subr.mxu0 0.0
    %235 = vmatpush2.msra.mxu0 0.0
    %236 = vmatprep.subr.mxu0 0.0
    %237 = vmatpush2.msra.mxu0 0.0
    %238 = vmatprep.subr.mxu0 0.0
    %239 = vmatpush2.msra.mxu0 0.0
    %240 = vmatprep.subr.mxu0 0.0
    %241 = vmatpush2.msra.mxu0 0.0
    %242 = vmatprep.subr.mxu0 0.0
    %243 = vmatpush2.msra.mxu0 0.0
    %244 = vmatprep.subr.mxu0 0.0
    %245 = vmatpush2.msra.mxu0 0.0
    %246 = vmatprep.subr.mxu0 0.0
    %247 = vmatpush2.msra.mxu0 0.0
    %248 = vmatprep.subr.mxu0 0.0
    %249 = vmatpush2.msra.mxu0 0.0
    %250 = vmatprep.subr.mxu0 0.0
    %251 = vmatpush2.msra.mxu0 0.0
    %252 = vmatprep.mubr.f32.mxu0 0.0
    %253 = vmatmul.mubr.f32.gmra.mxu0 %v184
    %v254 = vpop.f32.mrf.mxu0
    %v255 = vadd.f32 0.0, %v254
    %v256 = vpop.f32.mrf.mxu0
    %257 = vdwg.mxu0
    %v259 = vrot.slane %v103, 1
    %v261 = vmul.f32 %v255, %v259
    %v262 = vsel %vm179, %v261, -inf
    %263 = vmax.xlane.f32.xlu0 %v262
    %v264 = vpop.xlane.xlu0 %263
    %v265 = vrcp.pop %v264
    %v266 = vmul.f32 %v261, %v265
    %v267 = vlog2.pop %v265
    %v268 = vmul.f32 %v267, 0.6931472
    %v269 = vsub.f32 %v187, %v268
    %270 = vmatprep.subr.mxu0 0.0
    %271 = vmatpush1.msra.mxu0 %v101
    %272 = vmatprep.subr.mxu0 0.0
    %273 = vmatpush1.msra.mxu0 %v100
    %274 = vmatprep.subr.mxu0 0.0
    %275 = vmatpush1.msra.mxu0 %v99
    %276 = vmatprep.subr.mxu0 0.0
    %277 = vmatpush1.msra.mxu0 %v98
    %278 = vmatprep.subr.mxu0 0.0
    %279 = vmatpush1.msra.mxu0 %v97
    %280 = vmatprep.subr.mxu0 0.0
    %281 = vmatpush1.msra.mxu0 %v96
    %282 = vmatprep.subr.mxu0 0.0
    %283 = vmatpush1.msra.mxu0 %v95
    %284 = vmatprep.subr.mxu0 0.0
    %285 = vmatpush1.msra.mxu0 %v94
    %286 = vmatprep.subr.mxu0 0.0
    %287 = vmatpush1.msra.mxu0 %v93
    %288 = vmatprep.subr.mxu0 0.0
    %289 = vmatpush1.msra.mxu0 %v92
    %290 = vmatprep.subr.mxu0 0.0
    %291 = vmatpush1.msra.mxu0 %v91
    %292 = vmatprep.subr.mxu0 0.0
    %293 = vmatpush1.msra.mxu0 %v90
    %294 = vmatprep.subr.mxu0 0.0
    %295 = vmatpush1.msra.mxu0 %v89
    %296 = vmatprep.subr.mxu0 0.0
    %297 = vmatpush1.msra.mxu0 %v88
    %298 = vmatprep.subr.mxu0 0.0
    %299 = vmatpush1.msra.mxu0 %v87
    %300 = vmatprep.subr.mxu0 0.0
    %301 = vmatpush1.msra.mxu0 %v86
    %302 = vmatprep.subr.mxu0 0.0
    %303 = vmatpush2.msra.mxu0 0.0
    %304 = vmatprep.subr.mxu0 0.0
    %305 = vmatpush2.msra.mxu0 0.0
    %306 = vmatprep.subr.mxu0 0.0
    %307 = vmatpush2.msra.mxu0 0.0
    %308 = vmatprep.subr.mxu0 0.0
    %309 = vmatpush2.msra.mxu0 0.0
    %310 = vmatprep.subr.mxu0 0.0
    %311 = vmatpush2.msra.mxu0 0.0
    %312 = vmatprep.subr.mxu0 0.0
    %313 = vmatpush2.msra.mxu0 0.0
    %314 = vmatprep.subr.mxu0 0.0
    %315 = vmatpush2.msra.mxu0 0.0
    %316 = vmatprep.subr.mxu0 0.0
    %317 = vmatpush2.msra.mxu0 0.0
    %318 = vmatprep.subr.mxu0 0.0
    %319 = vmatpush2.msra.mxu0 0.0
    %320 = vmatprep.subr.mxu0 0.0
    %321 = vmatpush2.msra.mxu0 0.0
    %322 = vmatprep.subr.mxu0 0.0
    %323 = vmatpush2.msra.mxu0 0.0
    %324 = vmatprep.subr.mxu0 0.0
    %325 = vmatpush2.msra.mxu0 0.0
    %326 = vmatprep.subr.mxu0 0.0
    %327 = vmatpush2.msra.mxu0 0.0
    %328 = vmatprep.subr.mxu0 0.0
    %329 = vmatpush2.msra.mxu0 0.0
    %330 = vmatprep.subr.mxu0 0.0
    %331 = vmatpush2.msra.mxu0 0.0
    %332 = vmatprep.subr.mxu0 0.0
    %333 = vmatpush2.msra.mxu0 0.0
    %334 = vmatprep.mubr.f32.mxu0 0.0
    %335 = vmatmul.mubr.f32.gmra.mxu0 %v266
    %v336 = vpop.f32.mrf.mxu0
    %v337 = vadd.f32 0.0, %v336
    %v338 = vpop.f32.mrf.mxu0
    %339 = vdwg.mxu0
    %v340 = vrot.slane %v103, 2
    %v342 = vmul.f32 %v337, %v340
    %v343 = vsel %vm179, %v342, -inf
    %344 = vmax.xlane.f32.xlu0 %v343
    %v345 = vpop.xlane.xlu0 %344
    %v346 = vrcp.pop %v345
    %v347 = vmul.f32 %v342, %v346
    %v348 = vlog2.pop %v346
    %v349 = vmul.f32 %v348, 0.6931472
    %v350 = vsub.f32 %v269, %v349
    %351 = vmatprep.subr.mxu0 0.0
    %352 = vmatpush1.msra.mxu0 %v101
    %353 = vmatprep.subr.mxu0 0.0
    %354 = vmatpush1.msra.mxu0 %v100
    %355 = vmatprep.subr.mxu0 0.0
    %356 = vmatpush1.msra.mxu0 %v99
    %357 = vmatprep.subr.mxu0 0.0
    %358 = vmatpush1.msra.mxu0 %v98
    %359 = vmatprep.subr.mxu0 0.0
    %360 = vmatpush1.msra.mxu0 %v97
    %361 = vmatprep.subr.mxu0 0.0
    %362 = vmatpush1.msra.mxu0 %v96
    %363 = vmatprep.subr.mxu0 0.0
    %364 = vmatpush1.msra.mxu0 %v95
    %365 = vmatprep.subr.mxu0 0.0
    %366 = vmatpush1.msra.mxu0 %v94
    %367 = vmatprep.subr.mxu0 0.0
    %368 = vmatpush1.msra.mxu0 %v93
    %369 = vmatprep.subr.mxu0 0.0
    %370 = vmatpush1.msra.mxu0 %v92
    %371 = vmatprep.subr.mxu0 0.0
    %372 = vmatpush1.msra.mxu0 %v91
    %373 = vmatprep.subr.mxu0 0.0
    %374 = vmatpush1.msra.mxu0 %v90
    %375 = vmatprep.subr.mxu0 0.0
    %376 = vmatpush1.msra.mxu0 %v89
    %377 = vmatprep.subr.mxu0 0.0
    %378 = vmatpush1.msra.mxu0 %v88
    %379 = vmatprep.subr.mxu0 0.0
    %380 = vmatpush1.msra.mxu0 %v87
    %381 = vmatprep.subr.mxu0 0.0
    %382 = vmatpush1.msra.mxu0 %v86
    %383 = vmatprep.subr.mxu0 0.0
    %384 = vmatpush2.msra.mxu0 0.0
    %385 = vmatprep.subr.mxu0 0.0
    %386 = vmatpush2.msra.mxu0 0.0
    %387 = vmatprep.subr.mxu0 0.0
    %388 = vmatpush2.msra.mxu0 0.0
    %389 = vmatprep.subr.mxu0 0.0
    %390 = vmatpush2.msra.mxu0 0.0
    %391 = vmatprep.subr.mxu0 0.0
    %392 = vmatpush2.msra.mxu0 0.0
    %393 = vmatprep.subr.mxu0 0.0
    %394 = vmatpush2.msra.mxu0 0.0
    %395 = vmatprep.subr.mxu0 0.0
    %396 = vmatpush2.msra.mxu0 0.0
    %397 = vmatprep.subr.mxu0 0.0
    %398 = vmatpush2.msra.mxu0 0.0
    %399 = vmatprep.subr.mxu0 0.0
    %400 = vmatpush2.msra.mxu0 0.0
    %401 = vmatprep.subr.mxu0 0.0
    %402 = vmatpush2.msra.mxu0 0.0
    %403 = vmatprep.subr.mxu0 0.0
    %404 = vmatpush2.msra.mxu0 0.0
    %405 = vmatprep.subr.mxu0 0.0
    %406 = vmatpush2.msra.mxu0 0.0
    %407 = vmatprep.subr.mxu0 0.0
    %408 = vmatpush2.msra.mxu0 0.0
    %409 = vmatprep.subr.mxu0 0.0
    %410 = vmatpush2.msra.mxu0 0.0
    %411 = vmatprep.subr.mxu0 0.0
    %412 = vmatpush2.msra.mxu0 0.0
    %413 = vmatprep.subr.mxu0 0.0
    %414 = vmatpush2.msra.mxu0 0.0
    %415 = vmatprep.mubr.f32.mxu0 0.0
    %416 = vmatmul.mubr.f32.gmra.mxu0 %v347
    %v417 = vpop.f32.mrf.mxu0
    %v418 = vadd.f32 0.0, %v417
    %v419 = vpop.f32.mrf.mxu0
    %420 = vdwg.mxu0
    %v421 = vrot.slane %v103, 3
    %v423 = vmul.f32 %v418, %v421
    %v424 = vsel %vm179, %v423, -inf
    %425 = vmax.xlane.f32.xlu0 %v424
    %v426 = vpop.xlane.xlu0 %425
    %v427 = vrcp.pop %v426
    %v428 = vmul.f32 %v423, %v427
    %v429 = vlog2.pop %v427
    %v430 = vmul.f32 %v429, 0.6931472
    %v431 = vsub.f32 %v350, %v430
    %432 = vmatprep.subr.mxu0 0.0
    %433 = vmatpush1.msra.mxu0 %v101
    %434 = vmatprep.subr.mxu0 0.0
    %435 = vmatpush1.msra.mxu0 %v100
    %436 = vmatprep.subr.mxu0 0.0
    %437 = vmatpush1.msra.mxu0 %v99
    %438 = vmatprep.subr.mxu0 0.0
    %439 = vmatpush1.msra.mxu0 %v98
    %440 = vmatprep.subr.mxu0 0.0
    %441 = vmatpush1.msra.mxu0 %v97
    %442 = vmatprep.subr.mxu0 0.0
    %443 = vmatpush1.msra.mxu0 %v96
    %444 = vmatprep.subr.mxu0 0.0
    %445 = vmatpush1.msra.mxu0 %v95
    %446 = vmatprep.subr.mxu0 0.0
    %447 = vmatpush1.msra.mxu0 %v94
    %448 = vmatprep.subr.mxu0 0.0
    %449 = vmatpush1.msra.mxu0 %v93
    %450 = vmatprep.subr.mxu0 0.0
    %451 = vmatpush1.msra.mxu0 %v92
    %452 = vmatprep.subr.mxu0 0.0
    %453 = vmatpush1.msra.mxu0 %v91
    %454 = vmatprep.subr.mxu0 0.0
    %455 = vmatpush1.msra.mxu0 %v90
    %456 = vmatprep.subr.mxu0 0.0
    %457 = vmatpush1.msra.mxu0 %v89
    %458 = vmatprep.subr.mxu0 0.0
    %459 = vmatpush1.msra.mxu0 %v88
    %460 = vmatprep.subr.mxu0 0.0
    %461 = vmatpush1.msra.mxu0 %v87
    %462 = vmatprep.subr.mxu0 0.0
    %463 = vmatpush1.msra.mxu0 %v86
    %464 = vmatprep.subr.mxu0 0.0
    %465 = vmatpush2.msra.mxu0 0.0
    %466 = vmatprep.subr.mxu0 0.0
    %467 = vmatpush2.msra.mxu0 0.0
    %468 = vmatprep.subr.mxu0 0.0
    %469 = vmatpush2.msra.mxu0 0.0
    %470 = vmatprep.subr.mxu0 0.0
    %471 = vmatpush2.msra.mxu0 0.0
    %472 = vmatprep.subr.mxu0 0.0
    %473 = vmatpush2.msra.mxu0 0.0
    %474 = vmatprep.subr.mxu0 0.0
    %475 = vmatpush2.msra.mxu0 0.0
    %476 = vmatprep.subr.mxu0 0.0
    %477 = vmatpush2.msra.mxu0 0.0
    %478 = vmatprep.subr.mxu0 0.0
    %479 = vmatpush2.msra.mxu0 0.0
    %480 = vmatprep.subr.mxu0 0.0
    %481 = vmatpush2.msra.mxu0 0.0
    %482 = vmatprep.subr.mxu0 0.0
    %483 = vmatpush2.msra.mxu0 0.0
    %484 = vmatprep.subr.mxu0 0.0
    %485 = vmatpush2.msra.mxu0 0.0
    %486 = vmatprep.subr.mxu0 0.0
    %487 = vmatpush2.msra.mxu0 0.0
    %488 = vmatprep.subr.mxu0 0.0
    %489 = vmatpush2.msra.mxu0 0.0
    %490 = vmatprep.subr.mxu0 0.0
    %491 = vmatpush2.msra.mxu0 0.0
    %492 = vmatprep.subr.mxu0 0.0
    %493 = vmatpush2.msra.mxu0 0.0
    %494 = vmatprep.subr.mxu0 0.0
    %495 = vmatpush2.msra.mxu0 0.0
    %496 = vmatprep.mubr.f32.mxu0 0.0
    %497 = vmatmul.mubr.f32.gmra.mxu0 %v428
    %v498 = vpop.f32.mrf.mxu0
    %v499 = vadd.f32 0.0, %v498
    %v500 = vpop.f32.mrf.mxu0
    %501 = vdwg.mxu0
    %v502 = vrot.slane %v103, 4
    %v504 = vmul.f32 %v499, %v502
    %v505 = vsel %vm179, %v504, -inf
    %506 = vmax.xlane.f32.xlu0 %v505
    %v507 = vpop.xlane.xlu0 %506
    %v508 = vrcp.pop %v507
    %v509 = vmul.f32 %v504, %v508
    %v510 = vlog2.pop %v508
    %v511 = vmul.f32 %v510, 0.6931472
    %v512 = vsub.f32 %v431, %v511
    %513 = vmatprep.subr.mxu0 0.0
    %514 = vmatpush1.msra.mxu0 %v101
    %515 = vmatprep.subr.mxu0 0.0
    %516 = vmatpush1.msra.mxu0 %v100
    %517 = vmatprep.subr.mxu0 0.0
    %518 = vmatpush1.msra.mxu0 %v99
    %519 = vmatprep.subr.mxu0 0.0
    %520 = vmatpush1.msra.mxu0 %v98
    %521 = vmatprep.subr.mxu0 0.0
    %522 = vmatpush1.msra.mxu0 %v97
    %523 = vmatprep.subr.mxu0 0.0
    %524 = vmatpush1.msra.mxu0 %v96
    %525 = vmatprep.subr.mxu0 0.0
    %526 = vmatpush1.msra.mxu0 %v95
    %527 = vmatprep.subr.mxu0 0.0
    %528 = vmatpush1.msra.mxu0 %v94
    %529 = vmatprep.subr.mxu0 0.0
    %530 = vmatpush1.msra.mxu0 %v93
    %531 = vmatprep.subr.mxu0 0.0
    %532 = vmatpush1.msra.mxu0 %v92
    %533 = vmatprep.subr.mxu0 0.0
    %534 = vmatpush1.msra.mxu0 %v91
    %535 = vmatprep.subr.mxu0 0.0
    %536 = vmatpush1.msra.mxu0 %v90
    %537 = vmatprep.subr.mxu0 0.0
    %538 = vmatpush1.msra.mxu0 %v89
    %539 = vmatprep.subr.mxu0 0.0
    %540 = vmatpush1.msra.mxu0 %v88
    %541 = vmatprep.subr.mxu0 0.0
    %542 = vmatpush1.msra.mxu0 %v87
    %543 = vmatprep.subr.mxu0 0.0
    %544 = vmatpush1.msra.mxu0 %v86
    %545 = vmatprep.subr.mxu0 0.0
    %546 = vmatpush2.msra.mxu0 0.0
    %547 = vmatprep.subr.mxu0 0.0
    %548 = vmatpush2.msra.mxu0 0.0
    %549 = vmatprep.subr.mxu0 0.0
    %550 = vmatpush2.msra.mxu0 0.0
    %551 = vmatprep.subr.mxu0 0.0
    %552 = vmatpush2.msra.mxu0 0.0
    %553 = vmatprep.subr.mxu0 0.0
    %554 = vmatpush2.msra.mxu0 0.0
    %555 = vmatprep.subr.mxu0 0.0
    %556 = vmatpush2.msra.mxu0 0.0
    %557 = vmatprep.subr.mxu0 0.0
    %558 = vmatpush2.msra.mxu0 0.0
    %559 = vmatprep.subr.mxu0 0.0
    %560 = vmatpush2.msra.mxu0 0.0
    %561 = vmatprep.subr.mxu0 0.0
    %562 = vmatpush2.msra.mxu0 0.0
    %563 = vmatprep.subr.mxu0 0.0
    %564 = vmatpush2.msra.mxu0 0.0
    %565 = vmatprep.subr.mxu0 0.0
    %566 = vmatpush2.msra.mxu0 0.0
    %567 = vmatprep.subr.mxu0 0.0
    %568 = vmatpush2.msra.mxu0 0.0
    %569 = vmatprep.subr.mxu0 0.0
    %570 = vmatpush2.msra.mxu0 0.0
    %571 = vmatprep.subr.mxu0 0.0
    %572 = vmatpush2.msra.mxu0 0.0
    %573 = vmatprep.subr.mxu0 0.0
    %574 = vmatpush2.msra.mxu0 0.0
    %575 = vmatprep.subr.mxu0 0.0
    %576 = vmatpush2.msra.mxu0 0.0
    %577 = vmatprep.mubr.f32.mxu0 0.0
    %578 = vmatmul.mubr.f32.gmra.mxu0 %v509
    %v579 = vpop.f32.mrf.mxu0
    %v580 = vadd.f32 0.0, %v579
    %v581 = vpop.f32.mrf.mxu0
    %582 = vdwg.mxu0
    %v583 = vrot.slane %v103, 5
    %v585 = vmul.f32 %v580, %v583
    %v586 = vsel %vm179, %v585, -inf
    %587 = vmax.xlane.f32.xlu0 %v586
    %v588 = vpop.xlane.xlu0 %587
    %v589 = vrcp.pop %v588
    %v590 = vmul.f32 %v585, %v589
    %v591 = vlog2.pop %v589
    %v592 = vmul.f32 %v591, 0.6931472
    %v593 = vsub.f32 %v512, %v592
    %594 = vmatprep.subr.mxu0 0.0
    %595 = vmatpush1.msra.mxu0 %v101
    %596 = vmatprep.subr.mxu0 0.0
    %597 = vmatpush1.msra.mxu0 %v100
    %598 = vmatprep.subr.mxu0 0.0
    %599 = vmatpush1.msra.mxu0 %v99
    %600 = vmatprep.subr.mxu0 0.0
    %601 = vmatpush1.msra.mxu0 %v98
    %602 = vmatprep.subr.mxu0 0.0
    %603 = vmatpush1.msra.mxu0 %v97
    %604 = vmatprep.subr.mxu0 0.0
    %605 = vmatpush1.msra.mxu0 %v96
    %606 = vmatprep.subr.mxu0 0.0
    %607 = vmatpush1.msra.mxu0 %v95
    %608 = vmatprep.subr.mxu0 0.0
    %609 = vmatpush1.msra.mxu0 %v94
    %610 = vmatprep.subr.mxu0 0.0
    %611 = vmatpush1.msra.mxu0 %v93
    %612 = vmatprep.subr.mxu0 0.0
    %613 = vmatpush1.msra.mxu0 %v92
    %614 = vmatprep.subr.mxu0 0.0
    %615 = vmatpush1.msra.mxu0 %v91
    %616 = vmatprep.subr.mxu0 0.0
    %617 = vmatpush1.msra.mxu0 %v90
    %618 = vmatprep.subr.mxu0 0.0
    %619 = vmatpush1.msra.mxu0 %v89
    %620 = vmatprep.subr.mxu0 0.0
    %621 = vmatpush1.msra.mxu0 %v88
    %622 = vmatprep.subr.mxu0 0.0
    %623 = vmatpush1.msra.mxu0 %v87
    %624 = vmatprep.subr.mxu0 0.0
    %625 = vmatpush1.msra.mxu0 %v86
    %626 = vmatprep.subr.mxu0 0.0
    %627 = vmatpush2.msra.mxu0 0.0
    %628 = vmatprep.subr.mxu0 0.0
    %629 = vmatpush2.msra.mxu0 0.0
    %630 = vmatprep.subr.mxu0 0.0
    %631 = vmatpush2.msra.mxu0 0.0
    %632 = vmatprep.subr.mxu0 0.0
    %633 = vmatpush2.msra.mxu0 0.0
    %634 = vmatprep.subr.mxu0 0.0
    %635 = vmatpush2.msra.mxu0 0.0
    %636 = vmatprep.subr.mxu0 0.0
    %637 = vmatpush2.msra.mxu0 0.0
    %638 = vmatprep.subr.mxu0 0.0
    %639 = vmatpush2.msra.mxu0 0.0
    %640 = vmatprep.subr.mxu0 0.0
    %641 = vmatpush2.msra.mxu0 0.0
    %642 = vmatprep.subr.mxu0 0.0
    %643 = vmatpush2.msra.mxu0 0.0
    %644 = vmatprep.subr.mxu0 0.0
    %645 = vmatpush2.msra.mxu0 0.0
    %646 = vmatprep.subr.mxu0 0.0
    %647 = vmatpush2.msra.mxu0 0.0
    %648 = vmatprep.subr.mxu0 0.0
    %649 = vmatpush2.msra.mxu0 0.0
    %650 = vmatprep.subr.mxu0 0.0
    %651 = vmatpush2.msra.mxu0 0.0
    %652 = vmatprep.subr.mxu0 0.0
    %653 = vmatpush2.msra.mxu0 0.0
    %654 = vmatprep.subr.mxu0 0.0
    %655 = vmatpush2.msra.mxu0 0.0
    %656 = vmatprep.subr.mxu0 0.0
    %657 = vmatpush2.msra.mxu0 0.0
    %658 = vmatprep.mubr.f32.mxu0 0.0
    %659 = vmatmul.mubr.f32.gmra.mxu0 %v590
    %v660 = vpop.f32.mrf.mxu0
    %v661 = vadd.f32 0.0, %v660
    %v662 = vpop.f32.mrf.mxu0
    %663 = vdwg.mxu0
    %v664 = vrot.slane %v103, 6
    %v666 = vmul.f32 %v661, %v664
    %v667 = vsel %vm179, %v666, -inf
    %668 = vmax.xlane.f32.xlu0 %v667
    %v669 = vpop.xlane.xlu0 %668
    %v670 = vrcp.pop %v669
    %v671 = vmul.f32 %v666, %v670
    %v672 = vlog2.pop %v670
    %v673 = vmul.f32 %v672, 0.6931472
    %v674 = vsub.f32 %v593, %v673
    %675 = vmatprep.subr.mxu0 0.0
    %676 = vmatpush1.msra.mxu0 %v101
    %677 = vmatprep.subr.mxu0 0.0
    %678 = vmatpush1.msra.mxu0 %v100
    %679 = vmatprep.subr.mxu0 0.0
    %680 = vmatpush1.msra.mxu0 %v99
    %681 = vmatprep.subr.mxu0 0.0
    %682 = vmatpush1.msra.mxu0 %v98
    %683 = vmatprep.subr.mxu0 0.0
    %684 = vmatpush1.msra.mxu0 %v97
    %685 = vmatprep.subr.mxu0 0.0
    %686 = vmatpush1.msra.mxu0 %v96
    %687 = vmatprep.subr.mxu0 0.0
    %688 = vmatpush1.msra.mxu0 %v95
    %689 = vmatprep.subr.mxu0 0.0
    %690 = vmatpush1.msra.mxu0 %v94
    %691 = vmatprep.subr.mxu0 0.0
    %692 = vmatpush1.msra.mxu0 %v93
    %693 = vmatprep.subr.mxu0 0.0
    %694 = vmatpush1.msra.mxu0 %v92
    %695 = vmatprep.subr.mxu0 0.0
    %696 = vmatpush1.msra.mxu0 %v91
    %697 = vmatprep.subr.mxu0 0.0
    %698 = vmatpush1.msra.mxu0 %v90
    %699 = vmatprep.subr.mxu0 0.0
    %700 = vmatpush1.msra.mxu0 %v89
    %701 = vmatprep.subr.mxu0 0.0
    %702 = vmatpush1.msra.mxu0 %v88
    %703 = vmatprep.subr.mxu0 0.0
    %704 = vmatpush1.msra.mxu0 %v87
    %705 = vmatprep.subr.mxu0 0.0
    %706 = vmatpush1.msra.mxu0 %v86
    %707 = vmatprep.subr.mxu0 0.0
    %708 = vmatpush2.msra.mxu0 0.0
    %709 = vmatprep.subr.mxu0 0.0
    %710 = vmatpush2.msra.mxu0 0.0
    %711 = vmatprep.subr.mxu0 0.0
    %712 = vmatpush2.msra.mxu0 0.0
    %713 = vmatprep.subr.mxu0 0.0
    %714 = vmatpush2.msra.mxu0 0.0
    %715 = vmatprep.subr.mxu0 0.0
    %716 = vmatpush2.msra.mxu0 0.0
    %717 = vmatprep.subr.mxu0 0.0
    %718 = vmatpush2.msra.mxu0 0.0
    %719 = vmatprep.subr.mxu0 0.0
    %720 = vmatpush2.msra.mxu0 0.0
    %721 = vmatprep.subr.mxu0 0.0
    %722 = vmatpush2.msra.mxu0 0.0
    %723 = vmatprep.subr.mxu0 0.0
    %724 = vmatpush2.msra.mxu0 0.0
    %725 = vmatprep.subr.mxu0 0.0
    %726 = vmatpush2.msra.mxu0 0.0
    %727 = vmatprep.subr.mxu0 0.0
    %728 = vmatpush2.msra.mxu0 0.0
    %729 = vmatprep.subr.mxu0 0.0
    %730 = vmatpush2.msra.mxu0 0.0
    %731 = vmatprep.subr.mxu0 0.0
    %732 = vmatpush2.msra.mxu0 0.0
    %733 = vmatprep.subr.mxu0 0.0
    %734 = vmatpush2.msra.mxu0 0.0
    %735 = vmatprep.subr.mxu0 0.0
    %736 = vmatpush2.msra.mxu0 0.0
    %737 = vmatprep.subr.mxu0 0.0
    %738 = vmatpush2.msra.mxu0 0.0
    %739 = vmatprep.mubr.f32.mxu0 0.0
    %740 = vmatmul.mubr.f32.gmra.mxu0 %v671
    %v741 = vpop.f32.mrf.mxu0
    %v742 = vadd.f32 0.0, %v741
    %v743 = vpop.f32.mrf.mxu0
    %744 = vdwg.mxu0
    %v745 = vrot.slane %v103, 7
    %v747 = vmul.f32 %v742, %v745
    %v748 = vsel %vm179, %v747, -inf
    %749 = vmax.xlane.f32.xlu0 %v748
    %v750 = vpop.xlane.xlu0 %749
    %v751 = vrcp.pop %v750
    %v752 = vmul.f32 %v747, %v751
    %v753 = vlog2.pop %v751
    %v754 = vmul.f32 %v753, 0.6931472
    %v755 = vsub.f32 %v674, %v754
    %v756 = vld [vmem:[#allocation8 + $0x4] sm:$0x1]
    %v757 = vmul.f32 %v756, 1.442695
    %v758 = vpow.pop %v757
    %v759 = vmul.f32 %v752, %v758
    %v760 = vsel %vm179, %v759, 0.0
    %761 = vadd.xlane.f32.xlu0 %v760
    %v762 = vpop.xlane.xlu0 %761
    %v763 = vlog2.pop %v762
    %v764 = vmul.f32 %v763, 0.6931472
    %v765 = vadd.f32 %v755, %v764
    %v766 = vld [vmem:[#allocation5] sm:$0xff]
    %v767 = vmul.f32 %v85, %v766
    %768 = vadd.xlane.f32.xlu0 %v767
    %v769 = vpop.xlane.xlu0 %768
    %v770 = vrot.slane %v769, 4
    %v771 = vadd.f32 %v769, %v770
    %v772 = vrot.slane %v771, 2
    %v773 = vadd.f32 %v771, %v772
    %v774 = vrot.slane %v773, 1
    %v775 = vadd.f32 %v773, %v774
    %v776 = vld [vmem:[#allocation8] sm:$0xff]
    %v777 = vld [vmem:[#allocation8 + $0x8] sm:$0xff]
    %v778 = vld [vmem:[#allocation8 + $0x10] sm:$0xff]
    %v779 = vld [vmem:[#allocation8 + $0x18] sm:$0xff]
    %v780 = vld [vmem:[#allocation8 + $0x20] sm:$0xff]
    %v781 = vld [vmem:[#allocation8 + $0x28] sm:$0xff]
    %v782 = vld [vmem:[#allocation8 + $0x30] sm:$0xff]
    %v783 = vld [vmem:[#allocation8 + $0x38] sm:$0xff]
    %v784 = vld [vmem:[#allocation8 + $0x40] sm:$0xff]
    %v785 = vld [vmem:[#allocation8 + $0x48] sm:$0xff]
    %v786 = vld [vmem:[#allocation8 + $0x50] sm:$0xff]
    %v787 = vld [vmem:[#allocation8 + $0x58] sm:$0xff]
    %v788 = vld [vmem:[#allocation8 + $0x60] sm:$0xff]
    %v789 = vld [vmem:[#allocation8 + $0x68] sm:$0xff]
    %v790 = vld [vmem:[#allocation8 + $0x70] sm:$0xff]
    %v791 = vld [vmem:[#allocation8 + $0x78] sm:$0xff]
    %v792 = vld [vmem:[#allocation10] sm:$0xff]
    %v793 = vld [vmem:[#allocation10 + $0x8] sm:$0xff]
    %v794 = vld [vmem:[#allocation10 + $0x10] sm:$0xff]
    %v795 = vld [vmem:[#allocation10 + $0x18] sm:$0xff]
    %v796 = vld [vmem:[#allocation10 + $0x20] sm:$0xff]
    %v797 = vld [vmem:[#allocation10 + $0x28] sm:$0xff]
    %v798 = vld [vmem:[#allocation10 + $0x30] sm:$0xff]
    %v799 = vld [vmem:[#allocation10 + $0x38] sm:$0xff]
    %v800 = vld [vmem:[#allocation10 + $0x40] sm:$0xff]
    %v801 = vld [vmem:[#allocation10 + $0x48] sm:$0xff]
    %v802 = vld [vmem:[#allocation10 + $0x50] sm:$0xff]
    %v803 = vld [vmem:[#allocation10 + $0x58] sm:$0xff]
    %v804 = vld [vmem:[#allocation10 + $0x60] sm:$0xff]
    %v805 = vld [vmem:[#allocation10 + $0x68] sm:$0xff]
    %v806 = vld [vmem:[#allocation10 + $0x70] sm:$0xff]
    %v807 = vld [vmem:[#allocation10 + $0x78] sm:$0xff]
    %v808 = vmul.f32 %v776, %v792
    %v809 = vmul.f32 %v777, %v793
    %v810 = vmul.f32 %v778, %v794
    %v811 = vmul.f32 %v779, %v795
    %v812 = vmul.f32 %v780, %v796
    %v813 = vmul.f32 %v781, %v797
    %v814 = vmul.f32 %v782, %v798
    %v815 = vmul.f32 %v783, %v799
    %v816 = vmul.f32 %v784, %v800
    %v817 = vmul.f32 %v785, %v801
    %v818 = vmul.f32 %v786, %v802
    %v819 = vmul.f32 %v787, %v803
    %v820 = vmul.f32 %v788, %v804
    %v821 = vmul.f32 %v789, %v805
    %v822 = vmul.f32 %v790, %v806
    %v823 = vmul.f32 %v791, %v807
    %824 = vadd.xlane.f32.xlu0 %v808
    %v825 = vpop.xlane.xlu0 %824
    %826 = vadd.xlane.f32.xlu0 %v809
    %v827 = vpop.xlane.xlu0 %826
    %828 = vadd.xlane.f32.xlu0 %v810
    %v829 = vpop.xlane.xlu0 %828
    %830 = vadd.xlane.f32.xlu0 %v811
    %v831 = vpop.xlane.xlu0 %830
    %832 = vadd.xlane.f32.xlu0 %v812
    %v833 = vpop.xlane.xlu0 %832
    %834 = vadd.xlane.f32.xlu0 %v813
    %v835 = vpop.xlane.xlu0 %834
    %836 = vadd.xlane.f32.xlu0 %v814
    %v837 = vpop.xlane.xlu0 %836
    %838 = vadd.xlane.f32.xlu0 %v815
    %v839 = vpop.xlane.xlu0 %838
    %840 = vadd.xlane.f32.xlu0 %v816
    %v841 = vpop.xlane.xlu0 %840
    %842 = vadd.xlane.f32.xlu0 %v817
    %v843 = vpop.xlane.xlu0 %842
    %844 = vadd.xlane.f32.xlu0 %v818
    %v845 = vpop.xlane.xlu0 %844
    %846 = vadd.xlane.f32.xlu0 %v819
    %v847 = vpop.xlane.xlu0 %846
    %848 = vadd.xlane.f32.xlu0 %v820
    %v849 = vpop.xlane.xlu0 %848
    %850 = vadd.xlane.f32.xlu0 %v821
    %v851 = vpop.xlane.xlu0 %850
    %852 = vadd.xlane.f32.xlu0 %v822
    %v853 = vpop.xlane.xlu0 %852
    %854 = vadd.xlane.f32.xlu0 %v823
    %v855 = vpop.xlane.xlu0 %854
    %v856 = vadd.f32 %v825, %v827
    %v857 = vadd.f32 %v856, %v829
    %v858 = vadd.f32 %v857, %v831
    %v859 = vadd.f32 %v858, %v833
    %v860 = vadd.f32 %v859, %v835
    %v861 = vadd.f32 %v860, %v837
    %v862 = vadd.f32 %v861, %v839
    %v863 = vadd.f32 %v862, %v841
    %v864 = vadd.f32 %v863, %v843
    %v865 = vadd.f32 %v864, %v845
    %v866 = vadd.f32 %v865, %v847
    %v867 = vadd.f32 %v866, %v849
    %v868 = vadd.f32 %v867, %v851
    %v869 = vadd.f32 %v868, %v853
    %v870 = vadd.f32 %v869, %v855
    %v871 = vrot.slane %v870, 4
    %v872 = vadd.f32 %v870, %v871
    %v873 = vrot.slane %v872, 2
    %v874 = vadd.f32 %v872, %v873
    %v875 = vrot.slane %v874, 1
    %v876 = vadd.f32 %v874, %v875
    %v877 = vsub.f32 %v765, %v775
    %v878 = vsub.f32 %v877, %v876
    %v879 = vmul.f32 %v878, 0.125
    %vm880 = vcmask 0
    %881 = vst.msk [vmem:[#allocation11] sm:$0x1] %vm880, %v879
    // Predicated region
    $region42: #{tpu_custom_call.1} parent=1 // pred_check
      _
    $region43: #{tpu_custom_call.1} parent=1 // pred_check_branch
      %883 = sbr.rel (0) target = $region45
    $region44: #{tpu_custom_call.1} parent=1 // pred_region
      %s885 = ssub.s32 16, 16
      %886 = vsyncadd [#allocation4], %s885
      %s888 = sshll.u32 [#allocation11], 4
      %s889 = int_to_ptr.vmem [resolvable:$true] %s888
      %891 = dma.vmem_to_hbm [thread:$0]  %s889, 16, %s5, [#allocation4]
    $region45: #{tpu_custom_call.1} parent=1 // pred_fallthru
      _
    // Predicated region
    $region46: #{tpu_custom_call.1} parent=1 // pred_check
      _
    $region47: #{tpu_custom_call.1} parent=1 // pred_check_branch
      %893 = sbr.rel (0) target = $region49
    $region48: #{tpu_custom_call.1} parent=1 // pred_region
      %894 = dma.done [#allocation4], 16
    $region49: #{tpu_custom_call.1} parent=1 // pred_fallthru
      _
    %895 = vsyncpa [#allocation3], 1
    %896 = vsyncpa [#allocation6], 1
    %897 = vsyncpa [#allocation9], 1
    %898 = vsyncpa [#allocation4], 1

</llo_original>
